<compile_context>
chip_gen: v5e
topology: v5e:2x2
jax: 0.10.0
libtpu: 0.0.40
codegen_flags: <defaults>
</compile_context>

<pallas_src>
from functools import partial

import jax
import jax.numpy as jnp
from jax.experimental import pallas as pl
from jax.experimental.pallas import tpu as pltpu


# ---------------------------------------------------------------------------
# Pallas kernel: all per-frequency algebra for one (sample, row-tile) block.
# Block layout: (1, C, sf, th, W)  with  W = sf * w  on the lane dimension.
# ---------------------------------------------------------------------------
def datanet_kernel(alpha_ref,                      # SMEM (N,) f32 (scalar prefetch)
                   fax_re_ref, fax_im_ref,         # FFT2(x)
                   fbfy_re_ref, fbfy_im_ref,       # FBFy
                   fb_re_ref, fb_im_ref,           # FB
                   fx_re_ref, fx_im_ref,           # outputs: FX
                   *, sf, w):
    n = pl.program_id(0)
    alpha = alpha_ref[n]                           # scalar f32 from SMEM
    inv_alpha = 1.0 / alpha
    inv_sf2 = 1.0 / float(sf * sf)

    fb_re = fb_re_ref[0]                           # (C, sf, th, W)
    fb_im = fb_im_ref[0]

    # FR = FBFy + alpha * FFT2(x)      (alpha folded in via FFT linearity)
    fr_re = fbfy_re_ref[0] + alpha * fax_re_ref[0]
    fr_im = fbfy_im_ref[0] + alpha * fax_im_ref[0]

    # x1 = FB .* FR ;  F2B = |FB|^2 derived in-kernel (real, imag == 0)
    x1_re = fb_re * fr_re - fb_im * fr_im
    x1_im = fb_re * fr_im + fb_im * fr_re
    f2b = fb_re * fb_re + fb_im * fb_im

    # mean over the sf x sf spatial blocks:
    #   si blocks -> major axis 1 (cheap VPU adds),
    #   sj blocks -> sf contiguous w-wide static slices of the lane dim.
    def block_mean(a):                             # (C, sf, th, W) -> (C, th, w)
        acc = a[:, 0]
        for si in range(1, sf):
            acc = acc + a[:, si]
        out = acc[..., 0:w]
        for sj in range(1, sf):
            out = out + acc[..., sj * w:(sj + 1) * w]
        return out * inv_sf2

    fbr_re = block_mean(x1_re)
    fbr_im = block_mean(x1_im)
    invw = block_mean(f2b)                         # real

    # invWBR = FBR / (invW + alpha): real denominator -> one reciprocal.
    denom_inv = pl.reciprocal(invw + alpha)        # exact (approx=False)
    invwbr_re = fbr_re * denom_inv
    invwbr_im = fbr_im * denom_inv

    # Tile invWBR back to full width over sj (lane concat) and broadcast over si.
    t_re = jnp.concatenate([invwbr_re] * sf, axis=-1)[:, None, :, :]   # (C,1,th,W)
    t_im = jnp.concatenate([invwbr_im] * sf, axis=-1)[:, None, :, :]

    # FCBinvWBR = conj(FB) .* tiled(invWBR)
    fcb_re = fb_re * t_re + fb_im * t_im
    fcb_im = fb_re * t_im - fb_im * t_re

    # FX = (FR - FCBinvWBR) / alpha   -- full-block, lane-dense stores.
    fx_re_ref[0] = (fr_re - fcb_re) * inv_alpha
    fx_im_ref[0] = (fr_im - fcb_im) * inv_alpha


def _pick_row_tile(h, per_row_bytes, budget=24 * 1024 * 1024):
    """Largest row tile (multiple of 8 dividing h, or h itself) within VMEM budget."""
    if h * per_row_bytes <= budget:
        return h
    cands = [d for d in range(8, h, 8)
             if h % d == 0 and d * per_row_bytes <= budget]
    return max(cands) if cands else h


# ---------------------------------------------------------------------------
# Wrapper
# ---------------------------------------------------------------------------
@partial(jax.jit, static_argnums=(6,))
def datanet_forward(x, FB, FBC, F2B, FBFy, alpha, sf):
    """x: (N,C,H,W) f32; FB/FBC/F2B/FBFy: (N,C,H,W,2); alpha: (N,1,1,1); sf: int."""
    N, C, H, W = x.shape
    h, w = H // sf, W // sf

    # FBC = conj(FB) and F2B = |FB|^2 are re-derived inside the kernel (exact
    # for USRNet's construction) -> they are not streamed through HBM.
    del FBC, F2B

    # TODO(synk): no Pallas TPU FFT primitive; fft2/ifft2 stay in XLA.
    Fax = jnp.fft.fft2(x.astype(jnp.float32), axes=(-2, -1))

    def view5(a):   # (N,C,H,W) -> (N,C,sf,h,W): free row-major reshape, no copy
        return a.reshape(N, C, sf, h, W).astype(jnp.float32)

    planes = [
        view5(jnp.real(Fax)), view5(jnp.imag(Fax)),
        view5(FBFy[..., 0]),  view5(FBFy[..., 1]),
        view5(FB[..., 0]),    view5(FB[..., 1]),
    ]
    alpha_s = alpha.reshape(N).astype(jnp.float32)

    # VMEM budget: (6 in + 2 out planes) x double buffer x tile bytes.
    per_row_bytes = C * sf * W * 4 * 8 * 2
    th = _pick_row_tile(h, per_row_bytes)
    n_row_tiles = h // th

    blk = (1, C, sf, th, W)
    spec = pl.BlockSpec(blk, lambda n, r, alpha_ref: (n, 0, 0, r, 0))

    fx_re, fx_im = pl.pallas_call(
        partial(datanet_kernel, sf=sf, w=w),
        out_shape=(jax.ShapeDtypeStruct((N, C, sf, h, W), jnp.float32),
                   jax.ShapeDtypeStruct((N, C, sf, h, W), jnp.float32)),
        grid_spec=pltpu.PrefetchScalarGridSpec(
            num_scalar_prefetch=1,                 # alpha -> SMEM
            grid=(N, n_row_tiles),
            in_specs=[spec] * 6,
            out_specs=(spec, spec),
        ),
        compiler_params=pltpu.CompilerParams(
            dimension_semantics=("parallel", "parallel"),
            vmem_limit_bytes=48 * 1024 * 1024,
        ),
    )(alpha_s, *planes)

    FX = jax.lax.complex(fx_re, fx_im).reshape(N, C, H, W)   # free reshape back
    Xest = jnp.real(jnp.fft.ifft2(FX, axes=(-2, -1)))
    return Xest.astype(x.dtype)


# ---------------------------------------------------------------------------
# Plain-JAX reference mirroring the PyTorch module (for validation).
# ---------------------------------------------------------------------------
def _cmul(t1, t2):
    r1, i1 = t1[..., 0], t1[..., 1]
    r2, i2 = t2[..., 0], t2[..., 1]
    return jnp.stack([r1 * r2 - i1 * i2, r1 * i2 + i1 * r2], axis=-1)


def _cdiv(x, y):
    a, b = x[..., 0], x[..., 1]
    c, d = y[..., 0], y[..., 1]
    cd2 = c ** 2 + d ** 2
    return jnp.stack([(a * c + b * d) / cd2, (b * c - a * d) / cd2], axis=-1)


def _csum(x, y):
    return jnp.stack([x[..., 0] + y, x[..., 1]], axis=-1)


def _splits(a, sf):
    b = jnp.stack(jnp.split(a, sf, axis=2), axis=5)
    b = jnp.concatenate(jnp.split(b, sf, axis=3), axis=5)
    return b


def datanet_reference(x, FB, FBC, F2B, FBFy, alpha, sf):
    Fx = jnp.fft.fft2(alpha * x, axes=(-2, -1))
    FR = jnp.stack([FBFy[..., 0] + jnp.real(Fx),
                    FBFy[..., 1] + jnp.imag(Fx)], axis=-1)
    x1 = _cmul(FB, FR)
    FBR = jnp.mean(_splits(x1, sf), axis=-1)
    invW = jnp.mean(_splits(F2B, sf), axis=-1)
    invWBR = _cdiv(FBR, _csum(invW, alpha))
    FCBinvWBR = _cmul(FBC, jnp.tile(invWBR, (1, 1, sf, sf, 1)))
    FX = (FR - FCBinvWBR) / alpha[..., None]
    Xest = jnp.real(jnp.fft.ifft2(FX[..., 0] + 1j * FX[..., 1], axes=(-2, -1)))
    return Xest


if __name__ == "__main__":
    def run_case(key, N, C, sf, H, W):
        kx, kb, ky, ka = jax.random.split(key, 4)
        x = jax.random.normal(kx, (N, C, H, W), dtype=jnp.float32)

        # Synthetic Fourier-domain operators with the module's expected structure.
        fb_c = (jax.random.normal(kb, (N, C, H, W), dtype=jnp.float32)
                + 1j * jax.random.normal(jax.random.fold_in(kb, 1),
                                         (N, C, H, W), dtype=jnp.float32))
        FB = jnp.stack([jnp.real(fb_c), jnp.imag(fb_c)], axis=-1)
        FBC = jnp.stack([jnp.real(fb_c), -jnp.imag(fb_c)], axis=-1)        # conj(FB)
        F2B = jnp.stack([jnp.real(fb_c) ** 2 + jnp.imag(fb_c) ** 2,
                         jnp.zeros((N, C, H, W), jnp.float32)], axis=-1)   # |FB|^2
        fy_c = (jax.random.normal(ky, (N, C, H, W), dtype=jnp.float32)
                + 1j * jax.random.normal(jax.random.fold_in(ky, 1),
                                         (N, C, H, W), dtype=jnp.float32))
        FBFy = jnp.stack([jnp.real(fy_c), jnp.imag(fy_c)], axis=-1)
        alpha = jax.random.uniform(ka, (N, 1, 1, 1), jnp.float32, 0.5, 1.5)

        out = jax.block_until_ready(datanet_forward(x, FB, FBC, F2B, FBFy, alpha, sf))
        ref = datanet_reference(x, FB, FBC, F2B, FBFy, alpha, sf)
        assert out.shape == (N, C, H, W), out.shape
        err = float(jnp.max(jnp.abs(out - ref)))
        assert jnp.allclose(out, ref, atol=1e-3, rtol=1e-3), \
            f"mismatch vs reference (sf={sf}): {err}"

    key = jax.random.PRNGKey(0)
    # Lane-dense case (W multiple of 128, aligned sj slices).
    run_case(jax.random.fold_in(key, 0), N=2, C=3, sf=2, H=16, W=256)
    # Small sf=3 case exercising sub-tile lane slicing.
    run_case(jax.random.fold_in(key, 1), N=1, C=2, sf=3, H=24, W=48)

    print("KERNEL_OK")
</pallas_src>

<mosaic_0001>
module attributes {stable_mosaic.version = 11 : i64} {
  func.func @datanet_kernel(%arg0: i32, %arg1: i32, %arg2: memref<2xf32, #tpu.memory_space<smem>>, %arg3: memref<1x3x2x8x256xf32, #tpu.memory_space<vmem>>, %arg4: memref<1x3x2x8x256xf32, #tpu.memory_space<vmem>>, %arg5: memref<1x3x2x8x256xf32, #tpu.memory_space<vmem>>, %arg6: memref<1x3x2x8x256xf32, #tpu.memory_space<vmem>>, %arg7: memref<1x3x2x8x256xf32, #tpu.memory_space<vmem>>, %arg8: memref<1x3x2x8x256xf32, #tpu.memory_space<vmem>>, %arg9: memref<1x3x2x8x256xf32, #tpu.memory_space<vmem>>, %arg10: memref<1x3x2x8x256xf32, #tpu.memory_space<vmem>>) attributes {dimension_semantics = [#tpu.dimension_semantics<parallel>, #tpu.dimension_semantics<parallel>], iteration_bounds = array<i64: 2, 1>, scalar_prefetch = 1 : i64, scratch_operands = 0 : i64, tpu.core_type = #tpu.core_type<tc>, window_params = [{transform_indices = @transform_0, window_bounds = array<i64: 1, 3, 2, 8, 256>}, {transform_indices = @transform_1, window_bounds = array<i64: 1, 3, 2, 8, 256>}, {transform_indices = @transform_2, window_bounds = array<i64: 1, 3, 2, 8, 256>}, {transform_indices = @transform_3, window_bounds = array<i64: 1, 3, 2, 8, 256>}, {transform_indices = @transform_4, window_bounds = array<i64: 1, 3, 2, 8, 256>}, {transform_indices = @transform_5, window_bounds = array<i64: 1, 3, 2, 8, 256>}, {transform_indices = @transform_6, window_bounds = array<i64: 1, 3, 2, 8, 256>}, {transform_indices = @transform_7, window_bounds = array<i64: 1, 3, 2, 8, 256>}]} {
    %0 = arith.index_cast %arg0 : i32 to index
    %1 = memref.load %arg2[%0] : memref<2xf32, #tpu.memory_space<smem>>
    %cst = arith.constant 1.000000e+00 : f32
    %2 = arith.divf %cst, %1 : f32
    %c0 = arith.constant 0 : index
    %c0_0 = arith.constant 0 : index
    %c0_1 = arith.constant 0 : index
    %c0_2 = arith.constant 0 : index
    %c0_3 = arith.constant 0 : index
    %3 = vector.load %arg7[%c0, %c0_0, %c0_1, %c0_2, %c0_3] : memref<1x3x2x8x256xf32, #tpu.memory_space<vmem>>, vector<1x3x2x8x256xf32>
    %4 = vector.shape_cast %3 : vector<1x3x2x8x256xf32> to vector<3x2x8x256xf32>
    %c0_4 = arith.constant 0 : index
    %c0_5 = arith.constant 0 : index
    %c0_6 = arith.constant 0 : index
    %c0_7 = arith.constant 0 : index
    %c0_8 = arith.constant 0 : index
    %5 = vector.load %arg8[%c0_4, %c0_5, %c0_6, %c0_7, %c0_8] : memref<1x3x2x8x256xf32, #tpu.memory_space<vmem>>, vector<1x3x2x8x256xf32>
    %6 = vector.shape_cast %5 : vector<1x3x2x8x256xf32> to vector<3x2x8x256xf32>
    %c0_9 = arith.constant 0 : index
    %c0_10 = arith.constant 0 : index
    %c0_11 = arith.constant 0 : index
    %c0_12 = arith.constant 0 : index
    %c0_13 = arith.constant 0 : index
    %7 = vector.load %arg5[%c0_9, %c0_10, %c0_11, %c0_12, %c0_13] : memref<1x3x2x8x256xf32, #tpu.memory_space<vmem>>, vector<1x3x2x8x256xf32>
    %8 = vector.shape_cast %7 : vector<1x3x2x8x256xf32> to vector<3x2x8x256xf32>
    %c0_14 = arith.constant 0 : index
    %c0_15 = arith.constant 0 : index
    %c0_16 = arith.constant 0 : index
    %c0_17 = arith.constant 0 : index
    %c0_18 = arith.constant 0 : index
    %9 = vector.load %arg3[%c0_14, %c0_15, %c0_16, %c0_17, %c0_18] : memref<1x3x2x8x256xf32, #tpu.memory_space<vmem>>, vector<1x3x2x8x256xf32>
    %10 = vector.shape_cast %9 : vector<1x3x2x8x256xf32> to vector<3x2x8x256xf32>
    %11 = vector.broadcast %1 : f32 to vector<3x2x8x256xf32>
    %12 = arith.mulf %11, %10 : vector<3x2x8x256xf32>
    %13 = arith.addf %8, %12 : vector<3x2x8x256xf32>
    %c0_19 = arith.constant 0 : index
    %c0_20 = arith.constant 0 : index
    %c0_21 = arith.constant 0 : index
    %c0_22 = arith.constant 0 : index
    %c0_23 = arith.constant 0 : index
    %14 = vector.load %arg6[%c0_19, %c0_20, %c0_21, %c0_22, %c0_23] : memref<1x3x2x8x256xf32, #tpu.memory_space<vmem>>, vector<1x3x2x8x256xf32>
    %15 = vector.shape_cast %14 : vector<1x3x2x8x256xf32> to vector<3x2x8x256xf32>
    %c0_24 = arith.constant 0 : index
    %c0_25 = arith.constant 0 : index
    %c0_26 = arith.constant 0 : index
    %c0_27 = arith.constant 0 : index
    %c0_28 = arith.constant 0 : index
    %16 = vector.load %arg4[%c0_24, %c0_25, %c0_26, %c0_27, %c0_28] : memref<1x3x2x8x256xf32, #tpu.memory_space<vmem>>, vector<1x3x2x8x256xf32>
    %17 = vector.shape_cast %16 : vector<1x3x2x8x256xf32> to vector<3x2x8x256xf32>
    %18 = vector.broadcast %1 : f32 to vector<3x2x8x256xf32>
    %19 = arith.mulf %18, %17 : vector<3x2x8x256xf32>
    %20 = arith.addf %15, %19 : vector<3x2x8x256xf32>
    %21 = arith.mulf %4, %13 : vector<3x2x8x256xf32>
    %22 = arith.mulf %6, %20 : vector<3x2x8x256xf32>
    %23 = arith.subf %21, %22 : vector<3x2x8x256xf32>
    %24 = arith.mulf %4, %20 : vector<3x2x8x256xf32>
    %25 = arith.mulf %6, %13 : vector<3x2x8x256xf32>
    %26 = arith.addf %24, %25 : vector<3x2x8x256xf32>
    %27 = arith.mulf %4, %4 : vector<3x2x8x256xf32>
    %28 = arith.mulf %6, %6 : vector<3x2x8x256xf32>
    %29 = arith.addf %27, %28 : vector<3x2x8x256xf32>
    %30 = vector.extract_strided_slice %23 {offsets = [0, 0, 0, 0], sizes = [3, 1, 8, 256], strides = [1, 1, 1, 1]} : vector<3x2x8x256xf32> to vector<3x1x8x256xf32>
    %31 = vector.shape_cast %30 : vector<3x1x8x256xf32> to vector<3x8x256xf32>
    %32 = vector.extract_strided_slice %23 {offsets = [0, 1, 0, 0], sizes = [3, 1, 8, 256], strides = [1, 1, 1, 1]} : vector<3x2x8x256xf32> to vector<3x1x8x256xf32>
    %33 = vector.shape_cast %32 : vector<3x1x8x256xf32> to vector<3x8x256xf32>
    %34 = arith.addf %31, %33 : vector<3x8x256xf32>
    %35 = vector.extract_strided_slice %34 {offsets = [0, 0, 0], sizes = [3, 8, 128], strides = [1, 1, 1]} : vector<3x8x256xf32> to vector<3x8x128xf32>
    %36 = vector.extract_strided_slice %34 {offsets = [0, 0, 128], sizes = [3, 8, 128], strides = [1, 1, 1]} : vector<3x8x256xf32> to vector<3x8x128xf32>
    %37 = arith.addf %35, %36 : vector<3x8x128xf32>
    %cst_29 = arith.constant 2.500000e-01 : f32
    %38 = vector.broadcast %cst_29 : f32 to vector<3x8x128xf32>
    %39 = arith.mulf %37, %38 : vector<3x8x128xf32>
    %40 = vector.extract_strided_slice %26 {offsets = [0, 0, 0, 0], sizes = [3, 1, 8, 256], strides = [1, 1, 1, 1]} : vector<3x2x8x256xf32> to vector<3x1x8x256xf32>
    %41 = vector.shape_cast %40 : vector<3x1x8x256xf32> to vector<3x8x256xf32>
    %42 = vector.extract_strided_slice %26 {offsets = [0, 1, 0, 0], sizes = [3, 1, 8, 256], strides = [1, 1, 1, 1]} : vector<3x2x8x256xf32> to vector<3x1x8x256xf32>
    %43 = vector.shape_cast %42 : vector<3x1x8x256xf32> to vector<3x8x256xf32>
    %44 = arith.addf %41, %43 : vector<3x8x256xf32>
    %45 = vector.extract_strided_slice %44 {offsets = [0, 0, 0], sizes = [3, 8, 128], strides = [1, 1, 1]} : vector<3x8x256xf32> to vector<3x8x128xf32>
    %46 = vector.extract_strided_slice %44 {offsets = [0, 0, 128], sizes = [3, 8, 128], strides = [1, 1, 1]} : vector<3x8x256xf32> to vector<3x8x128xf32>
    %47 = arith.addf %45, %46 : vector<3x8x128xf32>
    %cst_30 = arith.constant 2.500000e-01 : f32
    %48 = vector.broadcast %cst_30 : f32 to vector<3x8x128xf32>
    %49 = arith.mulf %47, %48 : vector<3x8x128xf32>
    %50 = vector.extract_strided_slice %29 {offsets = [0, 0, 0, 0], sizes = [3, 1, 8, 256], strides = [1, 1, 1, 1]} : vector<3x2x8x256xf32> to vector<3x1x8x256xf32>
    %51 = vector.shape_cast %50 : vector<3x1x8x256xf32> to vector<3x8x256xf32>
    %52 = vector.extract_strided_slice %29 {offsets = [0, 1, 0, 0], sizes = [3, 1, 8, 256], strides = [1, 1, 1, 1]} : vector<3x2x8x256xf32> to vector<3x1x8x256xf32>
    %53 = vector.shape_cast %52 : vector<3x1x8x256xf32> to vector<3x8x256xf32>
    %54 = arith.addf %51, %53 : vector<3x8x256xf32>
    %55 = vector.extract_strided_slice %54 {offsets = [0, 0, 0], sizes = [3, 8, 128], strides = [1, 1, 1]} : vector<3x8x256xf32> to vector<3x8x128xf32>
    %56 = vector.extract_strided_slice %54 {offsets = [0, 0, 128], sizes = [3, 8, 128], strides = [1, 1, 1]} : vector<3x8x256xf32> to vector<3x8x128xf32>
    %57 = arith.addf %55, %56 : vector<3x8x128xf32>
    %cst_31 = arith.constant 2.500000e-01 : f32
    %58 = vector.broadcast %cst_31 : f32 to vector<3x8x128xf32>
    %59 = arith.mulf %57, %58 : vector<3x8x128xf32>
    %60 = vector.broadcast %1 : f32 to vector<3x8x128xf32>
    %61 = arith.addf %59, %60 : vector<3x8x128xf32>
    %62 = tpu.reciprocal %61 : vector<3x8x128xf32> -> vector<3x8x128xf32>
    %63 = arith.mulf %39, %62 : vector<3x8x128xf32>
    %64 = arith.mulf %49, %62 : vector<3x8x128xf32>
    %65 = tpu.concatenate %63, %63 in 2 : vector<3x8x128xf32>, vector<3x8x128xf32> -> vector<3x8x256xf32>
    %66 = vector.shape_cast %65 : vector<3x8x256xf32> to vector<3x1x8x256xf32>
    %67 = tpu.concatenate %64, %64 in 2 : vector<3x8x128xf32>, vector<3x8x128xf32> -> vector<3x8x256xf32>
    %68 = vector.shape_cast %67 : vector<3x8x256xf32> to vector<3x1x8x256xf32>
    %69 = vector.broadcast %66 : vector<3x1x8x256xf32> to vector<3x2x8x256xf32>
    %70 = arith.mulf %4, %69 : vector<3x2x8x256xf32>
    %71 = vector.broadcast %68 : vector<3x1x8x256xf32> to vector<3x2x8x256xf32>
    %72 = arith.mulf %6, %71 : vector<3x2x8x256xf32>
    %73 = arith.addf %70, %72 : vector<3x2x8x256xf32>
    %74 = vector.broadcast %68 : vector<3x1x8x256xf32> to vector<3x2x8x256xf32>
    %75 = arith.mulf %4, %74 : vector<3x2x8x256xf32>
    %76 = vector.broadcast %66 : vector<3x1x8x256xf32> to vector<3x2x8x256xf32>
    %77 = arith.mulf %6, %76 : vector<3x2x8x256xf32>
    %78 = arith.subf %75, %77 : vector<3x2x8x256xf32>
    %79 = arith.subf %13, %73 : vector<3x2x8x256xf32>
    %80 = vector.broadcast %2 : f32 to vector<3x2x8x256xf32>
    %81 = arith.mulf %79, %80 : vector<3x2x8x256xf32>
    %c0_32 = arith.constant 0 : index
    %c0_33 = arith.constant 0 : index
    %c0_34 = arith.constant 0 : index
    %c0_35 = arith.constant 0 : index
    %c0_36 = arith.constant 0 : index
    %82 = vector.load %arg9[%c0_32, %c0_33, %c0_34, %c0_35, %c0_36] : memref<1x3x2x8x256xf32, #tpu.memory_space<vmem>>, vector<1x3x2x8x256xf32>
    %83 = vector.shape_cast %82 : vector<1x3x2x8x256xf32> to vector<3x2x8x256xf32>
    %84 = vector.shape_cast %81 : vector<3x2x8x256xf32> to vector<1x3x2x8x256xf32>
    tpu.vector_store %arg9[%c0_32, %c0_33, %c0_34, %c0_35, %c0_36], %84 {strides = array<i32>} : memref<1x3x2x8x256xf32, #tpu.memory_space<vmem>>, vector<1x3x2x8x256xf32>,
    %85 = arith.subf %20, %78 : vector<3x2x8x256xf32>
    %86 = vector.broadcast %2 : f32 to vector<3x2x8x256xf32>
    %87 = arith.mulf %85, %86 : vector<3x2x8x256xf32>
    %c0_37 = arith.constant 0 : index
    %c0_38 = arith.constant 0 : index
    %c0_39 = arith.constant 0 : index
    %c0_40 = arith.constant 0 : index
    %c0_41 = arith.constant 0 : index
    %88 = vector.load %arg10[%c0_37, %c0_38, %c0_39, %c0_40, %c0_41] : memref<1x3x2x8x256xf32, #tpu.memory_space<vmem>>, vector<1x3x2x8x256xf32>
    %89 = vector.shape_cast %88 : vector<1x3x2x8x256xf32> to vector<3x2x8x256xf32>
    %90 = vector.shape_cast %87 : vector<3x2x8x256xf32> to vector<1x3x2x8x256xf32>
    tpu.vector_store %arg10[%c0_37, %c0_38, %c0_39, %c0_40, %c0_41], %90 {strides = array<i32>} : memref<1x3x2x8x256xf32, #tpu.memory_space<vmem>>, vector<1x3x2x8x256xf32>,
    return
  }
  func.func @transform_0(%arg0: i32, %arg1: i32, %arg2: memref<2xf32, #tpu.memory_space<smem>>) -> (i32, i32, i32, i32, i32) {
    %c0_i32 = arith.constant 0 : i32
    %c0_i32_0 = arith.constant 0 : i32
    %c0_i32_1 = arith.constant 0 : i32
    %c0_i32_2 = arith.constant 0 : i32
    return %arg0, %c0_i32, %c0_i32_0, %arg1, %c0_i32_1 : i32, i32, i32, i32, i32
  }
  func.func @transform_1(%arg0: i32, %arg1: i32, %arg2: memref<2xf32, #tpu.memory_space<smem>>) -> (i32, i32, i32, i32, i32) {
    %c0_i32 = arith.constant 0 : i32
    %c0_i32_0 = arith.constant 0 : i32
    %c0_i32_1 = arith.constant 0 : i32
    %c0_i32_2 = arith.constant 0 : i32
    return %arg0, %c0_i32, %c0_i32_0, %arg1, %c0_i32_1 : i32, i32, i32, i32, i32
  }
  func.func @transform_2(%arg0: i32, %arg1: i32, %arg2: memref<2xf32, #tpu.memory_space<smem>>) -> (i32, i32, i32, i32, i32) {
    %c0_i32 = arith.constant 0 : i32
    %c0_i32_0 = arith.constant 0 : i32
    %c0_i32_1 = arith.constant 0 : i32
    %c0_i32_2 = arith.constant 0 : i32
    return %arg0, %c0_i32, %c0_i32_0, %arg1, %c0_i32_1 : i32, i32, i32, i32, i32
  }
  func.func @transform_3(%arg0: i32, %arg1: i32, %arg2: memref<2xf32, #tpu.memory_space<smem>>) -> (i32, i32, i32, i32, i32) {
    %c0_i32 = arith.constant 0 : i32
    %c0_i32_0 = arith.constant 0 : i32
    %c0_i32_1 = arith.constant 0 : i32
    %c0_i32_2 = arith.constant 0 : i32
    return %arg0, %c0_i32, %c0_i32_0, %arg1, %c0_i32_1 : i32, i32, i32, i32, i32
  }
  func.func @transform_4(%arg0: i32, %arg1: i32, %arg2: memref<2xf32, #tpu.memory_space<smem>>) -> (i32, i32, i32, i32, i32) {
    %c0_i32 = arith.constant 0 : i32
    %c0_i32_0 = arith.constant 0 : i32
    %c0_i32_1 = arith.constant 0 : i32
    %c0_i32_2 = arith.constant 0 : i32
    return %arg0, %c0_i32, %c0_i32_0, %arg1, %c0_i32_1 : i32, i32, i32, i32, i32
  }
  func.func @transform_5(%arg0: i32, %arg1: i32, %arg2: memref<2xf32, #tpu.memory_space<smem>>) -> (i32, i32, i32, i32, i32) {
    %c0_i32 = arith.constant 0 : i32
    %c0_i32_0 = arith.constant 0 : i32
    %c0_i32_1 = arith.constant 0 : i32
    %c0_i32_2 = arith.constant 0 : i32
    return %arg0, %c0_i32, %c0_i32_0, %arg1, %c0_i32_1 : i32, i32, i32, i32, i32
  }
  func.func @transform_6(%arg0: i32, %arg1: i32, %arg2: memref<2xf32, #tpu.memory_space<smem>>) -> (i32, i32, i32, i32, i32) {
    %c0_i32 = arith.constant 0 : i32
    %c0_i32_0 = arith.constant 0 : i32
    %c0_i32_1 = arith.constant 0 : i32
    %c0_i32_2 = arith.constant 0 : i32
    return %arg0, %c0_i32, %c0_i32_0, %arg1, %c0_i32_1 : i32, i32, i32, i32, i32
  }
  func.func @transform_7(%arg0: i32, %arg1: i32, %arg2: memref<2xf32, #tpu.memory_space<smem>>) -> (i32, i32, i32, i32, i32) {
    %c0_i32 = arith.constant 0 : i32
    %c0_i32_0 = arith.constant 0 : i32
    %c0_i32_1 = arith.constant 0 : i32
    %c0_i32_2 = arith.constant 0 : i32
    return %arg0, %c0_i32, %c0_i32_0, %arg1, %c0_i32_1 : i32, i32, i32, i32, i32
  }
}

</mosaic_0001>

<llo_original>
// kernel: datanet_forward.1
$region0: #{datanet_forward.1}
  #allocation0 [shape = 'u32[]', space=smem, size = 0x4, offset = 0x4, fixed_abs, tag = 'smem constant byte address 0x4 - core index']
  #allocation1 [shape = 'u32[72,128]{1,0:T(1,128)}', space=vmem, size = 0x9000, scoped, tag = 'internal scratch']
  #allocation2 [shape = 's32[1]{0}', space=sflag, size = 0x4, scoped, tag = 'scoped memory for datanet_forward.1']
  #allocation3 [shape = 'u8[512]{0}', space=smem, size = 0x200, scoped, tag = 'prefetched SMEM operand 0']
  %s0 = inlined_call_operand.vmem [shape: f32[2], index: 0, kind: input, shape index: {}]
  %s1 = inlined_call_operand.vmem [shape: f32[2,3,2,8,256], index: 1, kind: input, shape index: {}]
  %s2 = inlined_call_operand.vmem [shape: f32[2,3,2,8,256], index: 2, kind: input, shape index: {}]
  %s3 = inlined_call_operand.vmem [shape: f32[2,3,2,8,256], index: 3, kind: input, shape index: {}]
  %s4 = inlined_call_operand.vmem [shape: f32[2,3,2,8,256], index: 4, kind: input, shape index: {}]
  %s5 = inlined_call_operand.vmem [shape: f32[2,3,2,8,256], index: 5, kind: input, shape index: {}]
  %s6 = inlined_call_operand.vmem [shape: f32[2,3,2,8,256], index: 6, kind: input, shape index: {}]
  %s7 = inlined_call_operand.vmem [shape: f32[2,3,2,8,256], index: 7, kind: output, shape index: {0}]
  %s8 = inlined_call_operand.vmem [shape: f32[2,3,2,8,256], index: 8, kind: output, shape index: {1}]
  %9 = xla_tuple %s7, %s8
  %s10 = sld [smem:[#allocation0]]
  $region65: #{datanet_forward.1} parent=0
    _
  %s12 = ssub.s32 1, %s10
  %s13 = scalar_select 0, %s12, %s10
  %s15 = sshll.u32 %s0, 4
  %s16 = int_to_ptr.vmem [resolvable:$true] %s15
  %18 = dma.vmem_to_smem %s16, 16, [#allocation3], [#allocation2]
  %20 = dma.done [#allocation2], 16
  %21 = sfence
  loop: start=0, step=1, limit=4
  $region2: #{datanet_forward.1} parent=0 // loop_pre_header
    _
  $region3: #{datanet_forward.1} parent=0 // loop_header
    %s23 = sphi 0, %s27
    %p24 = scmp.ge.s32.totalorder %s23, 4
    %s30 = sphi 0, %s42
    %s31 = sphi 0, %s38
    %s32 = sphi 0, %s30
    %s33 = sphi 0, %s31
    %s34 = sphi 0, %s32
    %s35 = sphi 0, %s33
    %s47 = sphi 0, %s49
    %s50 = sphi 0, %s47
    %s51 = sphi 0, %s50
    %s67 = sphi 0, %s51
    %s75 = sphi 0, %s77
    %s78 = sphi 0, %s75
    %s79 = sphi 0, %s78
    %s95 = sphi 0, %s79
    %s103 = sphi 0, %s105
    %s106 = sphi 0, %s103
    %s107 = sphi 0, %s106
    %s123 = sphi 0, %s107
    %s131 = sphi 0, %s133
    %s134 = sphi 0, %s131
    %s135 = sphi 0, %s134
    %s151 = sphi 0, %s135
    %s159 = sphi 0, %s161
    %s162 = sphi 0, %s159
    %s163 = sphi 0, %s162
    %s179 = sphi 0, %s163
    %s187 = sphi 0, %s189
    %s190 = sphi 0, %s187
    %s191 = sphi 0, %s190
    %s207 = sphi 0, %s191
    %s215 = sphi 0, %s217
    %s218 = sphi 0, %s215
    %s219 = sphi 0, %s218
    %s235 = sphi 0, %s219
    %s243 = sphi 0, %s245
    %s246 = sphi 0, %s243
    %s247 = sphi 0, %s246
    %s263 = sphi 0, %s247
  $region4: #{datanet_forward.1} parent=0 // loop_header_branch
    %26 = sbr.rel (%p24) target = $region8
  $region5: #{datanet_forward.1} parent=0 // loop_body
    %s28 = ssub.s32 %s23, 1
    %s29 = ssub.s32 %s23, 2
    %s36 = sadd.s32 1, %s31
    %p37 = scmp.ge.s32.totalorder %s36, 1
    %s38 = scalar_select %p37, 0, %s36
    %s39 = sadd.s32 1, %s30
    %s40 = scalar_select %p37, %s39, %s30
    %p41 = scmp.ge.s32.totalorder %s40, 2
    %s42 = scalar_select %p41, 0, %s40
    %s43 = ssub.s32 %s30, %s42
    %s44 = ssub.s32 %s31, %s38
    %s45 = sor.u32 %s43, %s44
    %p46 = scmp.eq.s32.totalorder %s45, 0
    %s48 = sadd.s32 %s47, 1
    %s49 = scalar_select %p46, %s47, %s48
    %p52 = pneg %p46
    %p53 = scmp.eq.s32.totalorder %s23, 1
    %p54 = por %p52, %p53
    %p55 = scmp.ne.s32.totalorder %s47, %s50
    %p56 = scmp.eq.s32.totalorder %s23, 0
    %p57 = por %p55, %p56
    %p58 = scmp.ne.s32.totalorder %s47, %s50
    %p59 = scmp.eq.s32.totalorder %s28, 1
    %p60 = por %p58, %p59
    %p61 = scmp.ne.s32.totalorder %s50, %s51
    %p62 = scmp.eq.s32.totalorder %s28, 0
    %p63 = por %p61, %p62
    %p64 = scmp.ne.s32.totalorder %s50, %s51
    %p65 = scmp.eq.s32.totalorder %s29, 1
    %p66 = por %p64, %p65
    %p68 = scmp.ne.s32.totalorder %s51, %s67
    %p69 = scmp.eq.s32.totalorder %s29, 0
    %p70 = por %p68, %p69
    %s71 = ssub.s32 %s30, %s42
    %s72 = ssub.s32 %s31, %s38
    %s73 = sor.u32 %s71, %s72
    %p74 = scmp.eq.s32.totalorder %s73, 0
    %s76 = sadd.s32 %s75, 1
    %s77 = scalar_select %p74, %s75, %s76
    %p80 = pneg %p74
    %p81 = scmp.eq.s32.totalorder %s23, 1
    %p82 = por %p80, %p81
    %p83 = scmp.ne.s32.totalorder %s75, %s78
    %p84 = scmp.eq.s32.totalorder %s23, 0
    %p85 = por %p83, %p84
    %p86 = scmp.ne.s32.totalorder %s75, %s78
    %p87 = scmp.eq.s32.totalorder %s28, 1
    %p88 = por %p86, %p87
    %p89 = scmp.ne.s32.totalorder %s78, %s79
    %p90 = scmp.eq.s32.totalorder %s28, 0
    %p91 = por %p89, %p90
    %p92 = scmp.ne.s32.totalorder %s78, %s79
    %p93 = scmp.eq.s32.totalorder %s29, 1
    %p94 = por %p92, %p93
    %p96 = scmp.ne.s32.totalorder %s79, %s95
    %p97 = scmp.eq.s32.totalorder %s29, 0
    %p98 = por %p96, %p97
    %s99 = ssub.s32 %s30, %s42
    %s100 = ssub.s32 %s31, %s38
    %s101 = sor.u32 %s99, %s100
    %p102 = scmp.eq.s32.totalorder %s101, 0
    %s104 = sadd.s32 %s103, 1
    %s105 = scalar_select %p102, %s103, %s104
    %p108 = pneg %p102
    %p109 = scmp.eq.s32.totalorder %s23, 1
    %p110 = por %p108, %p109
    %p111 = scmp.ne.s32.totalorder %s103, %s106
    %p112 = scmp.eq.s32.totalorder %s23, 0
    %p113 = por %p111, %p112
    %p114 = scmp.ne.s32.totalorder %s103, %s106
    %p115 = scmp.eq.s32.totalorder %s28, 1
    %p116 = por %p114, %p115
    %p117 = scmp.ne.s32.totalorder %s106, %s107
    %p118 = scmp.eq.s32.totalorder %s28, 0
    %p119 = por %p117, %p118
    %p120 = scmp.ne.s32.totalorder %s106, %s107
    %p121 = scmp.eq.s32.totalorder %s29, 1
    %p122 = por %p120, %p121
    %p124 = scmp.ne.s32.totalorder %s107, %s123
    %p125 = scmp.eq.s32.totalorder %s29, 0
    %p126 = por %p124, %p125
    %s127 = ssub.s32 %s30, %s42
    %s128 = ssub.s32 %s31, %s38
    %s129 = sor.u32 %s127, %s128
    %p130 = scmp.eq.s32.totalorder %s129, 0
    %s132 = sadd.s32 %s131, 1
    %s133 = scalar_select %p130, %s131, %s132
    %p136 = pneg %p130
    %p137 = scmp.eq.s32.totalorder %s23, 1
    %p138 = por %p136, %p137
    %p139 = scmp.ne.s32.totalorder %s131, %s134
    %p140 = scmp.eq.s32.totalorder %s23, 0
    %p141 = por %p139, %p140
    %p142 = scmp.ne.s32.totalorder %s131, %s134
    %p143 = scmp.eq.s32.totalorder %s28, 1
    %p144 = por %p142, %p143
    %p145 = scmp.ne.s32.totalorder %s134, %s135
    %p146 = scmp.eq.s32.totalorder %s28, 0
    %p147 = por %p145, %p146
    %p148 = scmp.ne.s32.totalorder %s134, %s135
    %p149 = scmp.eq.s32.totalorder %s29, 1
    %p150 = por %p148, %p149
    %p152 = scmp.ne.s32.totalorder %s135, %s151
    %p153 = scmp.eq.s32.totalorder %s29, 0
    %p154 = por %p152, %p153
    %s155 = ssub.s32 %s30, %s42
    %s156 = ssub.s32 %s31, %s38
    %s157 = sor.u32 %s155, %s156
    %p158 = scmp.eq.s32.totalorder %s157, 0
    %s160 = sadd.s32 %s159, 1
    %s161 = scalar_select %p158, %s159, %s160
    %p164 = pneg %p158
    %p165 = scmp.eq.s32.totalorder %s23, 1
    %p166 = por %p164, %p165
    %p167 = scmp.ne.s32.totalorder %s159, %s162
    %p168 = scmp.eq.s32.totalorder %s23, 0
    %p169 = por %p167, %p168
    %p170 = scmp.ne.s32.totalorder %s159, %s162
    %p171 = scmp.eq.s32.totalorder %s28, 1
    %p172 = por %p170, %p171
    %p173 = scmp.ne.s32.totalorder %s162, %s163
    %p174 = scmp.eq.s32.totalorder %s28, 0
    %p175 = por %p173, %p174
    %p176 = scmp.ne.s32.totalorder %s162, %s163
    %p177 = scmp.eq.s32.totalorder %s29, 1
    %p178 = por %p176, %p177
    %p180 = scmp.ne.s32.totalorder %s163, %s179
    %p181 = scmp.eq.s32.totalorder %s29, 0
    %p182 = por %p180, %p181
    %s183 = ssub.s32 %s30, %s42
    %s184 = ssub.s32 %s31, %s38
    %s185 = sor.u32 %s183, %s184
    %p186 = scmp.eq.s32.totalorder %s185, 0
    %s188 = sadd.s32 %s187, 1
    %s189 = scalar_select %p186, %s187, %s188
    %p192 = pneg %p186
    %p193 = scmp.eq.s32.totalorder %s23, 1
    %p194 = por %p192, %p193
    %p195 = scmp.ne.s32.totalorder %s187, %s190
    %p196 = scmp.eq.s32.totalorder %s23, 0
    %p197 = por %p195, %p196
    %p198 = scmp.ne.s32.totalorder %s187, %s190
    %p199 = scmp.eq.s32.totalorder %s28, 1
    %p200 = por %p198, %p199
    %p201 = scmp.ne.s32.totalorder %s190, %s191
    %p202 = scmp.eq.s32.totalorder %s28, 0
    %p203 = por %p201, %p202
    %p204 = scmp.ne.s32.totalorder %s190, %s191
    %p205 = scmp.eq.s32.totalorder %s29, 1
    %p206 = por %p204, %p205
    %p208 = scmp.ne.s32.totalorder %s191, %s207
    %p209 = scmp.eq.s32.totalorder %s29, 0
    %p210 = por %p208, %p209
    %s211 = ssub.s32 %s30, %s42
    %s212 = ssub.s32 %s31, %s38
    %s213 = sor.u32 %s211, %s212
    %p214 = scmp.eq.s32.totalorder %s213, 0
    %s216 = sadd.s32 %s215, 1
    %s217 = scalar_select %p214, %s215, %s216
    %p220 = pneg %p214
    %p221 = scmp.eq.s32.totalorder %s23, 1
    %p222 = por %p220, %p221
    %p223 = scmp.ne.s32.totalorder %s215, %s218
    %p224 = scmp.eq.s32.totalorder %s23, 0
    %p225 = por %p223, %p224
    %p226 = scmp.ne.s32.totalorder %s215, %s218
    %p227 = scmp.eq.s32.totalorder %s28, 1
    %p228 = por %p226, %p227
    %p229 = scmp.ne.s32.totalorder %s218, %s219
    %p230 = scmp.eq.s32.totalorder %s28, 0
    %p231 = por %p229, %p230
    %p232 = scmp.ne.s32.totalorder %s218, %s219
    %p233 = scmp.eq.s32.totalorder %s29, 1
    %p234 = por %p232, %p233
    %p236 = scmp.ne.s32.totalorder %s219, %s235
    %p237 = scmp.eq.s32.totalorder %s29, 0
    %p238 = por %p236, %p237
    %s239 = ssub.s32 %s30, %s42
    %s240 = ssub.s32 %s31, %s38
    %s241 = sor.u32 %s239, %s240
    %p242 = scmp.eq.s32.totalorder %s241, 0
    %s244 = sadd.s32 %s243, 1
    %s245 = scalar_select %p242, %s243, %s244
    %p248 = pneg %p242
    %p249 = scmp.eq.s32.totalorder %s23, 1
    %p250 = por %p248, %p249
    %p251 = scmp.ne.s32.totalorder %s243, %s246
    %p252 = scmp.eq.s32.totalorder %s23, 0
    %p253 = por %p251, %p252
    %p254 = scmp.ne.s32.totalorder %s243, %s246
    %p255 = scmp.eq.s32.totalorder %s28, 1
    %p256 = por %p254, %p255
    %p257 = scmp.ne.s32.totalorder %s246, %s247
    %p258 = scmp.eq.s32.totalorder %s28, 0
    %p259 = por %p257, %p258
    %p260 = scmp.ne.s32.totalorder %s246, %s247
    %p261 = scmp.eq.s32.totalorder %s29, 1
    %p262 = por %p260, %p261
    %p264 = scmp.ne.s32.totalorder %s247, %s263
    %p265 = scmp.eq.s32.totalorder %s29, 0
    %p266 = por %p264, %p265
    %p267 = scmp.le.s32.totalorder 1, %s23
    %p268 = scmp.lt.s32.totalorder %s23, 3
    %p269 = pnand %p267, %p268
    %p270 = pneg %p269
    // Predicated region
    $region9: #{datanet_forward.1} parent=5 // pred_check
      _
    $region10: #{datanet_forward.1} parent=5 // pred_check_branch
      %272 = sbr.rel (%p269) target = $region12
    $region11: #{datanet_forward.1} parent=5 // pred_region
      %s273 = ssub.s32 %s23, 1
    $region12: #{datanet_forward.1} parent=5 // pred_fallthru
      _
    %p274 = scmp.lt.s32.totalorder %s23, 2
    // Predicated region
    $region13: #{datanet_forward.1} parent=5 // pred_check
      %p275 = pneg %p274
    $region14: #{datanet_forward.1} parent=5 // pred_check_branch
      %277 = sbr.rel (%p275) target = $region16
    $region15: #{datanet_forward.1} parent=5 // pred_region
      // Predicated region
      $region17: #{datanet_forward.1} parent=15 // pred_check
        %p278 = pneg %p57
      $region18: #{datanet_forward.1} parent=15 // pred_check_branch
        %280 = sbr.rel (%p278) target = $region20
      $region19: #{datanet_forward.1} parent=15 // pred_region
        %p281 = scmp.lt.s32.totalorder %s30, 1
        %s282 = scalar_select %p281, %s30, 1
        %p283 = scmp.lt.s32.totalorder %s31, 0
        %s284 = scalar_select %p283, %s31, 0
        %s285 = smul.addr %s284, 2
        %s286 = smul.addr %s282, 12
        %s287 = sadd.s32 %s285, %s286
        %s288 = smul.addr %s287, 8
        %s289 = scalar_lea.vmem %s1, %s288
      $region20: #{datanet_forward.1} parent=15 // pred_fallthru
        _
      // Predicated region
      $region21: #{datanet_forward.1} parent=15 // pred_check
        %p290 = pneg %p85
      $region22: #{datanet_forward.1} parent=15 // pred_check_branch
        %292 = sbr.rel (%p290) target = $region24
      $region23: #{datanet_forward.1} parent=15 // pred_region
        %p293 = scmp.lt.s32.totalorder %s30, 1
        %s294 = scalar_select %p293, %s30, 1
        %p295 = scmp.lt.s32.totalorder %s31, 0
        %s296 = scalar_select %p295, %s31, 0
        %s297 = smul.addr %s296, 2
        %s298 = smul.addr %s294, 12
        %s299 = sadd.s32 %s297, %s298
        %s300 = smul.addr %s299, 8
        %s301 = scalar_lea.vmem %s2, %s300
      $region24: #{datanet_forward.1} parent=15 // pred_fallthru
        _
      // Predicated region
      $region25: #{datanet_forward.1} parent=15 // pred_check
        %p302 = pneg %p113
      $region26: #{datanet_forward.1} parent=15 // pred_check_branch
        %304 = sbr.rel (%p302) target = $region28
      $region27: #{datanet_forward.1} parent=15 // pred_region
        %p305 = scmp.lt.s32.totalorder %s30, 1
        %s306 = scalar_select %p305, %s30, 1
        %p307 = scmp.lt.s32.totalorder %s31, 0
        %s308 = scalar_select %p307, %s31, 0
        %s309 = smul.addr %s308, 2
        %s310 = smul.addr %s306, 12
        %s311 = sadd.s32 %s309, %s310
        %s312 = smul.addr %s311, 8
        %s313 = scalar_lea.vmem %s3, %s312
      $region28: #{datanet_forward.1} parent=15 // pred_fallthru
        _
      // Predicated region
      $region29: #{datanet_forward.1} parent=15 // pred_check
        %p314 = pneg %p141
      $region30: #{datanet_forward.1} parent=15 // pred_check_branch
        %316 = sbr.rel (%p314) target = $region32
      $region31: #{datanet_forward.1} parent=15 // pred_region
        %p317 = scmp.lt.s32.totalorder %s30, 1
        %s318 = scalar_select %p317, %s30, 1
        %p319 = scmp.lt.s32.totalorder %s31, 0
        %s320 = scalar_select %p319, %s31, 0
        %s321 = smul.addr %s320, 2
        %s322 = smul.addr %s318, 12
        %s323 = sadd.s32 %s321, %s322
        %s324 = smul.addr %s323, 8
        %s325 = scalar_lea.vmem %s4, %s324
      $region32: #{datanet_forward.1} parent=15 // pred_fallthru
        _
      // Predicated region
      $region33: #{datanet_forward.1} parent=15 // pred_check
        %p326 = pneg %p169
      $region34: #{datanet_forward.1} parent=15 // pred_check_branch
        %328 = sbr.rel (%p326) target = $region36
      $region35: #{datanet_forward.1} parent=15 // pred_region
        %p329 = scmp.lt.s32.totalorder %s30, 1
        %s330 = scalar_select %p329, %s30, 1
        %p331 = scmp.lt.s32.totalorder %s31, 0
        %s332 = scalar_select %p331, %s31, 0
        %s333 = smul.addr %s332, 2
        %s334 = smul.addr %s330, 12
        %s335 = sadd.s32 %s333, %s334
        %s336 = smul.addr %s335, 8
        %s337 = scalar_lea.vmem %s5, %s336
      $region36: #{datanet_forward.1} parent=15 // pred_fallthru
        _
      // Predicated region
      $region37: #{datanet_forward.1} parent=15 // pred_check
        %p338 = pneg %p197
      $region38: #{datanet_forward.1} parent=15 // pred_check_branch
        %340 = sbr.rel (%p338) target = $region40
      $region39: #{datanet_forward.1} parent=15 // pred_region
        %p341 = scmp.lt.s32.totalorder %s30, 1
        %s342 = scalar_select %p341, %s30, 1
        %p343 = scmp.lt.s32.totalorder %s31, 0
        %s344 = scalar_select %p343, %s31, 0
        %s345 = smul.addr %s344, 2
        %s346 = smul.addr %s342, 12
        %s347 = sadd.s32 %s345, %s346
        %s348 = smul.addr %s347, 8
        %s349 = scalar_lea.vmem %s6, %s348
      $region40: #{datanet_forward.1} parent=15 // pred_fallthru
        _
    $region16: #{datanet_forward.1} parent=5 // pred_fallthru
      _
    %p350 = scmp.le.s32.totalorder 1, %s23
    %p351 = scmp.lt.s32.totalorder %s23, 3
    %p352 = pnand %p350, %p351
    %p353 = pneg %p352
    // Predicated region
    $region41: #{datanet_forward.1} parent=5 // pred_check
      _
    $region42: #{datanet_forward.1} parent=5 // pred_check_branch
      %355 = sbr.rel (%p352) target = $region44
    $region43: #{datanet_forward.1} parent=5 // pred_region
      %s356 = ssub.s32 %s23, 1
      %p357 = scmp.lt.s32.totalorder %s32, 1
      %s358 = scalar_select %p357, %s32, 1
      %p359 = scmp.lt.s32.totalorder %s33, 0
      %s360 = scalar_select %p359, %s33, 0
      %s361 = smul.addr %s360, 2
      %s362 = smul.addr %s358, 12
      %s363 = sadd.s32 %s361, %s362
      %s364 = smul.addr %s363, 8
      %s365 = scalar_lea.vmem %s1, %s364
      %p366 = pneg %p63
      %p367 = pneg %p60
      %p368 = scmp.lt.s32.totalorder %s32, 1
      %s369 = scalar_select %p368, %s32, 1
      %p370 = scmp.lt.s32.totalorder %s33, 0
      %s371 = scalar_select %p370, %s33, 0
      %s372 = smul.addr %s371, 2
      %s373 = smul.addr %s369, 12
      %s374 = sadd.s32 %s372, %s373
      %s375 = smul.addr %s374, 8
      %s376 = scalar_lea.vmem %s2, %s375
      %p377 = pneg %p91
      %p378 = pneg %p88
      %p379 = scmp.lt.s32.totalorder %s32, 1
      %s380 = scalar_select %p379, %s32, 1
      %p381 = scmp.lt.s32.totalorder %s33, 0
      %s382 = scalar_select %p381, %s33, 0
      %s383 = smul.addr %s382, 2
      %s384 = smul.addr %s380, 12
      %s385 = sadd.s32 %s383, %s384
      %s386 = smul.addr %s385, 8
      %s387 = scalar_lea.vmem %s3, %s386
      %p388 = pneg %p119
      %p389 = pneg %p116
      %p390 = scmp.lt.s32.totalorder %s32, 1
      %s391 = scalar_select %p390, %s32, 1
      %p392 = scmp.lt.s32.totalorder %s33, 0
      %s393 = scalar_select %p392, %s33, 0
      %s394 = smul.addr %s393, 2
      %s395 = smul.addr %s391, 12
      %s396 = sadd.s32 %s394, %s395
      %s397 = smul.addr %s396, 8
      %s398 = scalar_lea.vmem %s4, %s397
      %p399 = pneg %p147
      %p400 = pneg %p144
      %p401 = scmp.lt.s32.totalorder %s32, 1
      %s402 = scalar_select %p401, %s32, 1
      %p403 = scmp.lt.s32.totalorder %s33, 0
      %s404 = scalar_select %p403, %s33, 0
      %s405 = smul.addr %s404, 2
      %s406 = smul.addr %s402, 12
      %s407 = sadd.s32 %s405, %s406
      %s408 = smul.addr %s407, 8
      %s409 = scalar_lea.vmem %s5, %s408
      %p410 = pneg %p175
      %p411 = pneg %p172
      %p412 = scmp.lt.s32.totalorder %s32, 1
      %s413 = scalar_select %p412, %s32, 1
      %p414 = scmp.lt.s32.totalorder %s33, 0
      %s415 = scalar_select %p414, %s33, 0
      %s416 = smul.addr %s415, 2
      %s417 = smul.addr %s413, 12
      %s418 = sadd.s32 %s416, %s417
      %s419 = smul.addr %s418, 8
      %s420 = scalar_lea.vmem %s6, %s419
      %p421 = pneg %p203
      %p422 = pneg %p200
      %p423 = pneg %p231
      %p424 = pneg %p228
      %p425 = scmp.lt.s32.totalorder %s32, 1
      %s426 = scalar_select %p425, %s32, 1
      %p427 = scmp.lt.s32.totalorder %s33, 0
      %s428 = scalar_select %p427, %s33, 0
      %s429 = smul.addr %s428, 2
      %s430 = smul.addr %s426, 12
      %s431 = sadd.s32 %s429, %s430
      %s432 = smul.addr %s431, 8
      %s433 = scalar_lea.vmem %s7, %s432
      %p434 = pneg %p259
      %p435 = pneg %p256
      %p436 = scmp.lt.s32.totalorder %s32, 1
      %s437 = scalar_select %p436, %s32, 1
      %p438 = scmp.lt.s32.totalorder %s33, 0
      %s439 = scalar_select %p438, %s33, 0
      %s440 = smul.addr %s439, 2
      %s441 = smul.addr %s437, 12
      %s442 = sadd.s32 %s440, %s441
      %s443 = smul.addr %s442, 8
      %s444 = scalar_lea.vmem %s8, %s443
      %p445 = scmp.lt.s32.totalorder %s32, 1
      %s446 = scalar_select %p445, %s32, 1
      %p447 = scmp.lt.s32.totalorder %s33, 0
      %s448 = scalar_select %p447, %s33, 0
      %s449 = smul.addr %s448, 2
      %s450 = smul.addr %s446, 12
      %s451 = sadd.s32 %s449, %s450
      %s452 = smul.addr %s451, 8
      %s453 = scalar_lea.vmem %s1, %s452
      %p454 = scmp.lt.s32.totalorder %s32, 1
      %s455 = scalar_select %p454, %s32, 1
      %p456 = scmp.lt.s32.totalorder %s33, 0
      %s457 = scalar_select %p456, %s33, 0
      %s458 = smul.addr %s457, 2
      %s459 = smul.addr %s455, 12
      %s460 = sadd.s32 %s458, %s459
      %s461 = smul.addr %s460, 8
      %s462 = scalar_lea.vmem %s2, %s461
      %p463 = scmp.lt.s32.totalorder %s32, 1
      %s464 = scalar_select %p463, %s32, 1
      %p465 = scmp.lt.s32.totalorder %s33, 0
      %s466 = scalar_select %p465, %s33, 0
      %s467 = smul.addr %s466, 2
      %s468 = smul.addr %s464, 12
      %s469 = sadd.s32 %s467, %s468
      %s470 = smul.addr %s469, 8
      %s471 = scalar_lea.vmem %s3, %s470
      %p472 = scmp.lt.s32.totalorder %s32, 1
      %s473 = scalar_select %p472, %s32, 1
      %p474 = scmp.lt.s32.totalorder %s33, 0
      %s475 = scalar_select %p474, %s33, 0
      %s476 = smul.addr %s475, 2
      %s477 = smul.addr %s473, 12
      %s478 = sadd.s32 %s476, %s477
      %s479 = smul.addr %s478, 8
      %s480 = scalar_lea.vmem %s4, %s479
      %p481 = scmp.lt.s32.totalorder %s32, 1
      %s482 = scalar_select %p481, %s32, 1
      %p483 = scmp.lt.s32.totalorder %s33, 0
      %s484 = scalar_select %p483, %s33, 0
      %s485 = smul.addr %s484, 2
      %s486 = smul.addr %s482, 12
      %s487 = sadd.s32 %s485, %s486
      %s488 = smul.addr %s487, 8
      %s489 = scalar_lea.vmem %s5, %s488
      %p490 = scmp.lt.s32.totalorder %s32, 1
      %s491 = scalar_select %p490, %s32, 1
      %p492 = scmp.lt.s32.totalorder %s33, 0
      %s493 = scalar_select %p492, %s33, 0
      %s494 = smul.addr %s493, 2
      %s495 = smul.addr %s491, 12
      %s496 = sadd.s32 %s494, %s495
      %s497 = smul.addr %s496, 8
      %s498 = scalar_lea.vmem %s6, %s497
      %p499 = scmp.lt.s32.totalorder %s32, 1
      %s500 = scalar_select %p499, %s32, 1
      %p501 = scmp.lt.s32.totalorder %s33, 0
      %s502 = scalar_select %p501, %s33, 0
      %s503 = smul.addr %s502, 2
      %s504 = smul.addr %s500, 12
      %s505 = sadd.s32 %s503, %s504
      %s506 = smul.addr %s505, 8
      %s507 = scalar_lea.vmem %s7, %s506
      %p508 = scmp.lt.s32.totalorder %s32, 1
      %s509 = scalar_select %p508, %s32, 1
      %p510 = scmp.lt.s32.totalorder %s33, 0
      %s511 = scalar_select %p510, %s33, 0
      %s512 = smul.addr %s511, 2
      %s513 = smul.addr %s509, 12
      %s514 = sadd.s32 %s512, %s513
      %s515 = smul.addr %s514, 8
      %s516 = scalar_lea.vmem %s8, %s515
      %s517 = sld [smem:[#allocation3 + %s32]]
      %v518 = vstv %s517
      %v519 = vrcp.pop %v518
      %v520 = vmul.f32 %v518, %v519
      %v521 = vsub.f32 1.0, %v520
      %v522 = vmul.f32 %v519, %v521
      %v523 = vadd.f32 %v519, %v522
      %vm524 = vweird.f32 %v518
      %vm525 = vweird.f32 %v519
      %vm526 = vmor %vm524, %vm525
      %v527 = vsel %vm526, %v519, %v523
      %v528 = vand.u32 2147483647, %v518
      %vm529 = vcmp.eq.f32.partialorder %v528, 8.507059e+37
      %v530 = vand.u32 %v518, 2147483648
      %v531 = vor.u32 1.1754944e-38, %v530
      %v532 = vsel %vm529, %v531, %v527
      %s533 = vtos %v532
      %v534 = vld [vmem:[%s489] sm:$0xff]
      %v535 = vld [vmem:[%s489 + $0x8] sm:$0xff]
      %v536 = vld [vmem:[%s489 + $0x10] sm:$0xff]
      %v537 = vld [vmem:[%s489 + $0x18] sm:$0xff]
      %v538 = vld [vmem:[%s489 + $0x20] sm:$0xff]
      %v539 = vld [vmem:[%s489 + $0x28] sm:$0xff]
      %v540 = vld [vmem:[%s489 + $0x30] sm:$0xff]
      %v541 = vld [vmem:[%s489 + $0x38] sm:$0xff]
      %v542 = vld [vmem:[%s489 + $0x40] sm:$0xff]
      %v543 = vld [vmem:[%s489 + $0x48] sm:$0xff]
      %v544 = vld [vmem:[%s489 + $0x50] sm:$0xff]
      %v545 = vld [vmem:[%s489 + $0x58] sm:$0xff]
      %v546 = vld [vmem:[%s498] sm:$0xff]
      %v547 = vld [vmem:[%s498 + $0x8] sm:$0xff]
      %v548 = vld [vmem:[%s498 + $0x10] sm:$0xff]
      %v549 = vld [vmem:[%s498 + $0x18] sm:$0xff]
      %v550 = vld [vmem:[%s498 + $0x20] sm:$0xff]
      %v551 = vld [vmem:[%s498 + $0x28] sm:$0xff]
      %v552 = vld [vmem:[%s498 + $0x30] sm:$0xff]
      %v553 = vld [vmem:[%s498 + $0x38] sm:$0xff]
      %v554 = vld [vmem:[%s498 + $0x40] sm:$0xff]
      %v555 = vld [vmem:[%s498 + $0x48] sm:$0xff]
      %v556 = vld [vmem:[%s498 + $0x50] sm:$0xff]
      %v557 = vld [vmem:[%s498 + $0x58] sm:$0xff]
      %v558 = vld [vmem:[%s471] sm:$0xff]
      %v559 = vld [vmem:[%s471 + $0x8] sm:$0xff]
      %v560 = vld [vmem:[%s471 + $0x10] sm:$0xff]
      %v561 = vld [vmem:[%s471 + $0x18] sm:$0xff]
      %v562 = vld [vmem:[%s471 + $0x20] sm:$0xff]
      %v563 = vld [vmem:[%s471 + $0x28] sm:$0xff]
      %v564 = vld [vmem:[%s471 + $0x30] sm:$0xff]
      %v565 = vld [vmem:[%s471 + $0x38] sm:$0xff]
      %v566 = vld [vmem:[%s471 + $0x40] sm:$0xff]
      %v567 = vld [vmem:[%s471 + $0x48] sm:$0xff]
      %v568 = vld [vmem:[%s471 + $0x50] sm:$0xff]
      %v569 = vld [vmem:[%s471 + $0x58] sm:$0xff]
      %v570 = vld [vmem:[%s453] sm:$0xff]
      %v571 = vld [vmem:[%s453 + $0x8] sm:$0xff]
      %v572 = vld [vmem:[%s453 + $0x10] sm:$0xff]
      %v573 = vld [vmem:[%s453 + $0x18] sm:$0xff]
      %v574 = vld [vmem:[%s453 + $0x20] sm:$0xff]
      %v575 = vld [vmem:[%s453 + $0x28] sm:$0xff]
      %v576 = vld [vmem:[%s453 + $0x30] sm:$0xff]
      %v577 = vld [vmem:[%s453 + $0x38] sm:$0xff]
      %v578 = vld [vmem:[%s453 + $0x40] sm:$0xff]
      %v579 = vld [vmem:[%s453 + $0x48] sm:$0xff]
      %v580 = vld [vmem:[%s453 + $0x50] sm:$0xff]
      %v581 = vld [vmem:[%s453 + $0x58] sm:$0xff]
      %v582 = vstv %s517
      %v583 = vmul.f32 %v582, %v570
      %v584 = vmul.f32 %v582, %v571
      %v585 = vmul.f32 %v582, %v572
      %v586 = vmul.f32 %v582, %v573
      %v587 = vmul.f32 %v582, %v574
      %v588 = vmul.f32 %v582, %v575
      %v589 = vmul.f32 %v582, %v576
      %v590 = vmul.f32 %v582, %v577
      %v591 = vmul.f32 %v582, %v578
      %v592 = vmul.f32 %v582, %v579
      %v593 = vmul.f32 %v582, %v580
      %v594 = vmul.f32 %v582, %v581
      %v595 = vadd.f32 %v558, %v583
      %v596 = vadd.f32 %v559, %v584
      %v597 = vadd.f32 %v560, %v585
      %v598 = vadd.f32 %v561, %v586
      %v599 = vadd.f32 %v562, %v587
      %v600 = vadd.f32 %v563, %v588
      %v601 = vadd.f32 %v564, %v589
      %v602 = vadd.f32 %v565, %v590
      %v603 = vadd.f32 %v566, %v591
      %v604 = vadd.f32 %v567, %v592
      %v605 = vadd.f32 %v568, %v593
      %v606 = vadd.f32 %v569, %v594
      %v607 = vld [vmem:[%s480] sm:$0xff]
      %v608 = vld [vmem:[%s480 + $0x8] sm:$0xff]
      %v609 = vld [vmem:[%s480 + $0x10] sm:$0xff]
      %v610 = vld [vmem:[%s480 + $0x18] sm:$0xff]
      %v611 = vld [vmem:[%s480 + $0x20] sm:$0xff]
      %v612 = vld [vmem:[%s480 + $0x28] sm:$0xff]
      %v613 = vld [vmem:[%s480 + $0x30] sm:$0xff]
      %v614 = vld [vmem:[%s480 + $0x38] sm:$0xff]
      %v615 = vld [vmem:[%s480 + $0x40] sm:$0xff]
      %v616 = vld [vmem:[%s480 + $0x48] sm:$0xff]
      %v617 = vld [vmem:[%s480 + $0x50] sm:$0xff]
      %v618 = vld [vmem:[%s480 + $0x58] sm:$0xff]
      %v619 = vld [vmem:[%s462] sm:$0xff]
      %v620 = vld [vmem:[%s462 + $0x8] sm:$0xff]
      %v621 = vld [vmem:[%s462 + $0x10] sm:$0xff]
      %v622 = vld [vmem:[%s462 + $0x18] sm:$0xff]
      %v623 = vld [vmem:[%s462 + $0x20] sm:$0xff]
      %v624 = vld [vmem:[%s462 + $0x28] sm:$0xff]
      %v625 = vld [vmem:[%s462 + $0x30] sm:$0xff]
      %v626 = vld [vmem:[%s462 + $0x38] sm:$0xff]
      %v627 = vld [vmem:[%s462 + $0x40] sm:$0xff]
      %v628 = vld [vmem:[%s462 + $0x48] sm:$0xff]
      %v629 = vld [vmem:[%s462 + $0x50] sm:$0xff]
      %v630 = vld [vmem:[%s462 + $0x58] sm:$0xff]
      %v631 = vmul.f32 %v582, %v619
      %v632 = vmul.f32 %v582, %v620
      %v633 = vmul.f32 %v582, %v621
      %v634 = vmul.f32 %v582, %v622
      %v635 = vmul.f32 %v582, %v623
      %v636 = vmul.f32 %v582, %v624
      %v637 = vmul.f32 %v582, %v625
      %v638 = vmul.f32 %v582, %v626
      %v639 = vmul.f32 %v582, %v627
      %v640 = vmul.f32 %v582, %v628
      %v641 = vmul.f32 %v582, %v629
      %v642 = vmul.f32 %v582, %v630
      %v643 = vadd.f32 %v607, %v631
      %v644 = vadd.f32 %v608, %v632
      %v645 = vadd.f32 %v609, %v633
      %v646 = vadd.f32 %v610, %v634
      %v647 = vadd.f32 %v611, %v635
      %v648 = vadd.f32 %v612, %v636
      %v649 = vadd.f32 %v613, %v637
      %v650 = vadd.f32 %v614, %v638
      %v651 = vadd.f32 %v615, %v639
      %v652 = vadd.f32 %v616, %v640
      %v653 = vadd.f32 %v617, %v641
      %v654 = vadd.f32 %v618, %v642
      %v655 = vmul.f32 %v534, %v595
      %v656 = vmul.f32 %v535, %v596
      %v657 = vmul.f32 %v536, %v597
      %v658 = vmul.f32 %v537, %v598
      %v659 = vmul.f32 %v538, %v599
      %v660 = vmul.f32 %v539, %v600
      %v661 = vmul.f32 %v540, %v601
      %v662 = vmul.f32 %v541, %v602
      %v663 = vmul.f32 %v542, %v603
      %v664 = vmul.f32 %v543, %v604
      %v665 = vmul.f32 %v544, %v605
      %v666 = vmul.f32 %v545, %v606
      %v667 = vmul.f32 %v546, %v643
      %v668 = vmul.f32 %v547, %v644
      %v669 = vmul.f32 %v548, %v645
      %v670 = vmul.f32 %v549, %v646
      %v671 = vmul.f32 %v550, %v647
      %v672 = vmul.f32 %v551, %v648
      %v673 = vmul.f32 %v552, %v649
      %v674 = vmul.f32 %v553, %v650
      %v675 = vmul.f32 %v554, %v651
      %v676 = vmul.f32 %v555, %v652
      %v677 = vmul.f32 %v556, %v653
      %v678 = vmul.f32 %v557, %v654
      %v679 = vsub.f32 %v655, %v667
      %v680 = vsub.f32 %v656, %v668
      %v681 = vsub.f32 %v657, %v669
      %v682 = vsub.f32 %v658, %v670
      %v683 = vsub.f32 %v659, %v671
      %v684 = vsub.f32 %v660, %v672
      %v685 = vsub.f32 %v661, %v673
      %v686 = vsub.f32 %v662, %v674
      %v687 = vsub.f32 %v663, %v675
      %v688 = vsub.f32 %v664, %v676
      %v689 = vsub.f32 %v665, %v677
      %v690 = vsub.f32 %v666, %v678
      %v691 = vmul.f32 %v534, %v643
      %v692 = vmul.f32 %v535, %v644
      %v693 = vmul.f32 %v536, %v645
      %v694 = vmul.f32 %v537, %v646
      %v695 = vmul.f32 %v538, %v647
      %v696 = vmul.f32 %v539, %v648
      %v697 = vmul.f32 %v540, %v649
      %v698 = vmul.f32 %v541, %v650
      %v699 = vmul.f32 %v542, %v651
      %v700 = vmul.f32 %v543, %v652
      %v701 = vmul.f32 %v544, %v653
      %v702 = vmul.f32 %v545, %v654
      %v703 = vmul.f32 %v546, %v595
      %v704 = vmul.f32 %v547, %v596
      %v705 = vmul.f32 %v548, %v597
      %v706 = vmul.f32 %v549, %v598
      %v707 = vmul.f32 %v550, %v599
      %v708 = vmul.f32 %v551, %v600
      %v709 = vmul.f32 %v552, %v601
      %v710 = vmul.f32 %v553, %v602
      %v711 = vmul.f32 %v554, %v603
      %v712 = vmul.f32 %v555, %v604
      %v713 = vmul.f32 %v556, %v605
      %v714 = vmul.f32 %v557, %v606
      %v715 = vadd.f32 %v691, %v703
      %v716 = vadd.f32 %v692, %v704
      %v717 = vadd.f32 %v693, %v705
      %v718 = vadd.f32 %v694, %v706
      %v719 = vadd.f32 %v695, %v707
      %v720 = vadd.f32 %v696, %v708
      %v721 = vadd.f32 %v697, %v709
      %v722 = vadd.f32 %v698, %v710
      %v723 = vadd.f32 %v699, %v711
      %v724 = vadd.f32 %v700, %v712
      %v725 = vadd.f32 %v701, %v713
      %v726 = vadd.f32 %v702, %v714
      %v727 = vmul.f32 %v534, %v534
      %v728 = vmul.f32 %v535, %v535
      %v729 = vmul.f32 %v536, %v536
      %v730 = vmul.f32 %v537, %v537
      %v731 = vmul.f32 %v538, %v538
      %v732 = vmul.f32 %v539, %v539
      %v733 = vmul.f32 %v540, %v540
      %v734 = vmul.f32 %v541, %v541
      %v735 = vmul.f32 %v542, %v542
      %v736 = vmul.f32 %v543, %v543
      %v737 = vmul.f32 %v544, %v544
      %v738 = vmul.f32 %v545, %v545
      %v739 = vmul.f32 %v546, %v546
      %v740 = vmul.f32 %v547, %v547
      %v741 = vmul.f32 %v548, %v548
      %v742 = vmul.f32 %v549, %v549
      %v743 = vmul.f32 %v550, %v550
      %v744 = vmul.f32 %v551, %v551
      %v745 = vmul.f32 %v552, %v552
      %v746 = vmul.f32 %v553, %v553
      %v747 = vmul.f32 %v554, %v554
      %v748 = vmul.f32 %v555, %v555
      %v749 = vmul.f32 %v556, %v556
      %v750 = vmul.f32 %v557, %v557
      %v751 = vadd.f32 %v727, %v739
      %v752 = vadd.f32 %v728, %v740
      %v753 = vadd.f32 %v729, %v741
      %v754 = vadd.f32 %v730, %v742
      %v755 = vadd.f32 %v731, %v743
      %v756 = vadd.f32 %v732, %v744
      %v757 = vadd.f32 %v733, %v745
      %v758 = vadd.f32 %v734, %v746
      %v759 = vadd.f32 %v735, %v747
      %v760 = vadd.f32 %v736, %v748
      %v761 = vadd.f32 %v737, %v749
      %v762 = vadd.f32 %v738, %v750
      %v763 = vadd.f32 %v679, %v681
      %v764 = vadd.f32 %v680, %v682
      %v765 = vadd.f32 %v683, %v685
      %v766 = vadd.f32 %v684, %v686
      %v767 = vadd.f32 %v687, %v689
      %v768 = vadd.f32 %v688, %v690
      %v769 = vadd.f32 %v763, %v764
      %v770 = vadd.f32 %v765, %v766
      %v771 = vadd.f32 %v767, %v768
      %v772 = vmul.f32 %v769, 0.25
      %v773 = vmul.f32 %v770, 0.25
      %v774 = vmul.f32 %v771, 0.25
      %v775 = vadd.f32 %v715, %v717
      %v776 = vadd.f32 %v716, %v718
      %v777 = vadd.f32 %v719, %v721
      %v778 = vadd.f32 %v720, %v722
      %v779 = vadd.f32 %v723, %v725
      %v780 = vadd.f32 %v724, %v726
      %v781 = vadd.f32 %v775, %v776
      %v782 = vadd.f32 %v777, %v778
      %v783 = vadd.f32 %v779, %v780
      %v784 = vmul.f32 %v781, 0.25
      %v785 = vmul.f32 %v782, 0.25
      %v786 = vmul.f32 %v783, 0.25
      %v787 = vadd.f32 %v751, %v753
      %v788 = vadd.f32 %v752, %v754
      %v789 = vadd.f32 %v755, %v757
      %v790 = vadd.f32 %v756, %v758
      %v791 = vadd.f32 %v759, %v761
      %v792 = vadd.f32 %v760, %v762
      %v793 = vadd.f32 %v787, %v788
      %v794 = vadd.f32 %v789, %v790
      %v795 = vadd.f32 %v791, %v792
      %v796 = vmul.f32 %v793, 0.25
      %v797 = vmul.f32 %v794, 0.25
      %v798 = vmul.f32 %v795, 0.25
      %v799 = vadd.f32 %v796, %v582
      %v800 = vadd.f32 %v797, %v582
      %v801 = vadd.f32 %v798, %v582
      %v802 = vrcp.pop %v799
      %v803 = vmul.f32 %v799, %v802
      %v804 = vsub.f32 1.0, %v803
      %v805 = vmul.f32 %v802, %v804
      %v806 = vadd.f32 %v802, %v805
      %vm807 = vweird.f32 %v799
      %vm808 = vweird.f32 %v802
      %vm809 = vmor %vm807, %vm808
      %v810 = vsel %vm809, %v802, %v806
      %v811 = vand.u32 2147483647, %v799
      %vm812 = vcmp.eq.f32.partialorder %v811, 8.507059e+37
      %v813 = vand.u32 %v799, 2147483648
      %v814 = vor.u32 1.1754944e-38, %v813
      %v815 = vsel %vm812, %v814, %v810
      %v816 = vrcp.pop %v800
      %v817 = vmul.f32 %v800, %v816
      %v818 = vsub.f32 1.0, %v817
      %v819 = vmul.f32 %v816, %v818
      %v820 = vadd.f32 %v816, %v819
      %vm821 = vweird.f32 %v800
      %vm822 = vweird.f32 %v816
      %vm823 = vmor %vm821, %vm822
      %v824 = vsel %vm823, %v816, %v820
      %v825 = vand.u32 2147483647, %v800
      %vm826 = vcmp.eq.f32.partialorder %v825, 8.507059e+37
      %v827 = vand.u32 %v800, 2147483648
      %v828 = vor.u32 1.1754944e-38, %v827
      %v829 = vsel %vm826, %v828, %v824
      %v830 = vrcp.pop %v801
      %v831 = vmul.f32 %v801, %v830
      %v832 = vsub.f32 1.0, %v831
      %v833 = vmul.f32 %v830, %v832
      %v834 = vadd.f32 %v830, %v833
      %vm835 = vweird.f32 %v801
      %vm836 = vweird.f32 %v830
      %vm837 = vmor %vm835, %vm836
      %v838 = vsel %vm837, %v830, %v834
      %v839 = vand.u32 2147483647, %v801
      %vm840 = vcmp.eq.f32.partialorder %v839, 8.507059e+37
      %v841 = vand.u32 %v801, 2147483648
      %v842 = vor.u32 1.1754944e-38, %v841
      %v843 = vsel %vm840, %v842, %v838
      %v844 = vmul.f32 %v772, %v815
      %v845 = vmul.f32 %v773, %v829
      %v846 = vmul.f32 %v774, %v843
      %v847 = vmul.f32 %v784, %v815
      %v848 = vmul.f32 %v785, %v829
      %v849 = vmul.f32 %v786, %v843
      %v850 = vmul.f32 %v534, %v844
      %v851 = vmul.f32 %v535, %v844
      %v852 = vmul.f32 %v536, %v844
      %v853 = vmul.f32 %v537, %v844
      %v854 = vmul.f32 %v538, %v845
      %v855 = vmul.f32 %v539, %v845
      %v856 = vmul.f32 %v540, %v845
      %v857 = vmul.f32 %v541, %v845
      %v858 = vmul.f32 %v542, %v846
      %v859 = vmul.f32 %v543, %v846
      %v860 = vmul.f32 %v544, %v846
      %v861 = vmul.f32 %v545, %v846
      %v862 = vmul.f32 %v546, %v847
      %v863 = vmul.f32 %v547, %v847
      %v864 = vmul.f32 %v548, %v847
      %v865 = vmul.f32 %v549, %v847
      %v866 = vmul.f32 %v550, %v848
      %v867 = vmul.f32 %v551, %v848
      %v868 = vmul.f32 %v552, %v848
      %v869 = vmul.f32 %v553, %v848
      %v870 = vmul.f32 %v554, %v849
      %v871 = vmul.f32 %v555, %v849
      %v872 = vmul.f32 %v556, %v849
      %v873 = vmul.f32 %v557, %v849
      %v874 = vadd.f32 %v850, %v862
      %v875 = vadd.f32 %v851, %v863
      %v876 = vadd.f32 %v852, %v864
      %v877 = vadd.f32 %v853, %v865
      %v878 = vadd.f32 %v854, %v866
      %v879 = vadd.f32 %v855, %v867
      %v880 = vadd.f32 %v856, %v868
      %v881 = vadd.f32 %v857, %v869
      %v882 = vadd.f32 %v858, %v870
      %v883 = vadd.f32 %v859, %v871
      %v884 = vadd.f32 %v860, %v872
      %v885 = vadd.f32 %v861, %v873
      %v886 = vmul.f32 %v534, %v847
      %v887 = vmul.f32 %v535, %v847
      %v888 = vmul.f32 %v536, %v847
      %v889 = vmul.f32 %v537, %v847
      %v890 = vmul.f32 %v538, %v848
      %v891 = vmul.f32 %v539, %v848
      %v892 = vmul.f32 %v540, %v848
      %v893 = vmul.f32 %v541, %v848
      %v894 = vmul.f32 %v542, %v849
      %v895 = vmul.f32 %v543, %v849
      %v896 = vmul.f32 %v544, %v849
      %v897 = vmul.f32 %v545, %v849
      %v898 = vmul.f32 %v546, %v844
      %v899 = vmul.f32 %v547, %v844
      %v900 = vmul.f32 %v548, %v844
      %v901 = vmul.f32 %v549, %v844
      %v902 = vmul.f32 %v550, %v845
      %v903 = vmul.f32 %v551, %v845
      %v904 = vmul.f32 %v552, %v845
      %v905 = vmul.f32 %v553, %v845
      %v906 = vmul.f32 %v554, %v846
      %v907 = vmul.f32 %v555, %v846
      %v908 = vmul.f32 %v556, %v846
      %v909 = vmul.f32 %v557, %v846
      %v910 = vsub.f32 %v886, %v898
      %v911 = vsub.f32 %v887, %v899
      %v912 = vsub.f32 %v888, %v900
      %v913 = vsub.f32 %v889, %v901
      %v914 = vsub.f32 %v890, %v902
      %v915 = vsub.f32 %v891, %v903
      %v916 = vsub.f32 %v892, %v904
      %v917 = vsub.f32 %v893, %v905
      %v918 = vsub.f32 %v894, %v906
      %v919 = vsub.f32 %v895, %v907
      %v920 = vsub.f32 %v896, %v908
      %v921 = vsub.f32 %v897, %v909
      %v922 = vsub.f32 %v595, %v874
      %v923 = vsub.f32 %v596, %v875
      %v924 = vsub.f32 %v597, %v876
      %v925 = vsub.f32 %v598, %v877
      %v926 = vsub.f32 %v599, %v878
      %v927 = vsub.f32 %v600, %v879
      %v928 = vsub.f32 %v601, %v880
      %v929 = vsub.f32 %v602, %v881
      %v930 = vsub.f32 %v603, %v882
      %v931 = vsub.f32 %v604, %v883
      %v932 = vsub.f32 %v605, %v884
      %v933 = vsub.f32 %v606, %v885
      %v934 = vstv %s533
      %v935 = vmul.f32 %v922, %v934
      %v936 = vmul.f32 %v923, %v934
      %v937 = vmul.f32 %v924, %v934
      %v938 = vmul.f32 %v925, %v934
      %v939 = vmul.f32 %v926, %v934
      %v940 = vmul.f32 %v927, %v934
      %v941 = vmul.f32 %v928, %v934
      %v942 = vmul.f32 %v929, %v934
      %v943 = vmul.f32 %v930, %v934
      %v944 = vmul.f32 %v931, %v934
      %v945 = vmul.f32 %v932, %v934
      %v946 = vmul.f32 %v933, %v934
      %947 = vst [vmem:[%s507] sm:$0xff] %v935
      %948 = vst [vmem:[%s507 + $0x8] sm:$0xff] %v936
      %949 = vst [vmem:[%s507 + $0x10] sm:$0xff] %v937
      %950 = vst [vmem:[%s507 + $0x18] sm:$0xff] %v938
      %951 = vst [vmem:[%s507 + $0x20] sm:$0xff] %v939
      %952 = vst [vmem:[%s507 + $0x28] sm:$0xff] %v940
      %953 = vst [vmem:[%s507 + $0x30] sm:$0xff] %v941
      %954 = vst [vmem:[%s507 + $0x38] sm:$0xff] %v942
      %955 = vst [vmem:[%s507 + $0x40] sm:$0xff] %v943
      %956 = vst [vmem:[%s507 + $0x48] sm:$0xff] %v944
      %957 = vst [vmem:[%s507 + $0x50] sm:$0xff] %v945
      %958 = vst [vmem:[%s507 + $0x58] sm:$0xff] %v946
      %v959 = vsub.f32 %v643, %v910
      %v960 = vsub.f32 %v644, %v911
      %v961 = vsub.f32 %v645, %v912
      %v962 = vsub.f32 %v646, %v913
      %v963 = vsub.f32 %v647, %v914
      %v964 = vsub.f32 %v648, %v915
      %v965 = vsub.f32 %v649, %v916
      %v966 = vsub.f32 %v650, %v917
      %v967 = vsub.f32 %v651, %v918
      %v968 = vsub.f32 %v652, %v919
      %v969 = vsub.f32 %v653, %v920
      %v970 = vsub.f32 %v654, %v921
      %v971 = vmul.f32 %v959, %v934
      %v972 = vmul.f32 %v960, %v934
      %v973 = vmul.f32 %v961, %v934
      %v974 = vmul.f32 %v962, %v934
      %v975 = vmul.f32 %v963, %v934
      %v976 = vmul.f32 %v964, %v934
      %v977 = vmul.f32 %v965, %v934
      %v978 = vmul.f32 %v966, %v934
      %v979 = vmul.f32 %v967, %v934
      %v980 = vmul.f32 %v968, %v934
      %v981 = vmul.f32 %v969, %v934
      %v982 = vmul.f32 %v970, %v934
      %983 = vst [vmem:[%s516] sm:$0xff] %v971
      %984 = vst [vmem:[%s516 + $0x8] sm:$0xff] %v972
      %985 = vst [vmem:[%s516 + $0x10] sm:$0xff] %v973
      %986 = vst [vmem:[%s516 + $0x18] sm:$0xff] %v974
      %987 = vst [vmem:[%s516 + $0x20] sm:$0xff] %v975
      %988 = vst [vmem:[%s516 + $0x28] sm:$0xff] %v976
      %989 = vst [vmem:[%s516 + $0x30] sm:$0xff] %v977
      %990 = vst [vmem:[%s516 + $0x38] sm:$0xff] %v978
      %991 = vst [vmem:[%s516 + $0x40] sm:$0xff] %v979
      %992 = vst [vmem:[%s516 + $0x48] sm:$0xff] %v980
      %993 = vst [vmem:[%s516 + $0x50] sm:$0xff] %v981
      %994 = vst [vmem:[%s516 + $0x58] sm:$0xff] %v982
      %p995 = scmp.lt.s32.totalorder %s32, 1
      %s996 = scalar_select %p995, %s32, 1
      %p997 = scmp.lt.s32.totalorder %s33, 0
      %s998 = scalar_select %p997, %s33, 0
      %s999 = smul.addr %s998, 2
      %s1000 = smul.addr %s996, 12
      %s1001 = sadd.s32 %s999, %s1000
      %s1002 = smul.addr %s1001, 8
      %s1003 = scalar_lea.vmem %s7, %s1002
      %p1004 = scmp.lt.s32.totalorder %s32, 1
      %s1005 = scalar_select %p1004, %s32, 1
      %p1006 = scmp.lt.s32.totalorder %s33, 0
      %s1007 = scalar_select %p1006, %s33, 0
      %s1008 = smul.addr %s1007, 2
      %s1009 = smul.addr %s1005, 12
      %s1010 = sadd.s32 %s1008, %s1009
      %s1011 = smul.addr %s1010, 8
      %s1012 = scalar_lea.vmem %s8, %s1011
      // Predicated region
      $region45: #{datanet_forward.1} parent=43 // pred_check
        %p1013 = pneg %p228
      $region46: #{datanet_forward.1} parent=43 // pred_check_branch
        %1015 = sbr.rel (%p1013) target = $region48
      $region47: #{datanet_forward.1} parent=43 // pred_region
        _
      $region48: #{datanet_forward.1} parent=43 // pred_fallthru
        _
      // Predicated region
      $region49: #{datanet_forward.1} parent=43 // pred_check
        %p1016 = pneg %p256
      $region50: #{datanet_forward.1} parent=43 // pred_check_branch
        %1018 = sbr.rel (%p1016) target = $region52
      $region51: #{datanet_forward.1} parent=43 // pred_region
        _
      $region52: #{datanet_forward.1} parent=43 // pred_fallthru
        _
    $region44: #{datanet_forward.1} parent=5 // pred_fallthru
      _
    %p1019 = scmp.le.s32.totalorder 2, %s23
    // Predicated region
    $region53: #{datanet_forward.1} parent=5 // pred_check
      %p1020 = pneg %p1019
    $region54: #{datanet_forward.1} parent=5 // pred_check_branch
      %1022 = sbr.rel (%p1020) target = $region56
    $region55: #{datanet_forward.1} parent=5 // pred_region
      %s1023 = ssub.s32 %s23, 2
      // Predicated region
      $region57: #{datanet_forward.1} parent=55 // pred_check
        %p1024 = pneg %p234
      $region58: #{datanet_forward.1} parent=55 // pred_check_branch
        %1026 = sbr.rel (%p1024) target = $region60
      $region59: #{datanet_forward.1} parent=55 // pred_region
        %p1027 = scmp.lt.s32.totalorder %s34, 1
        %s1028 = scalar_select %p1027, %s34, 1
        %p1029 = scmp.lt.s32.totalorder %s35, 0
        %s1030 = scalar_select %p1029, %s35, 0
        %s1031 = smul.addr %s1030, 2
        %s1032 = smul.addr %s1028, 12
        %s1033 = sadd.s32 %s1031, %s1032
        %s1034 = smul.addr %s1033, 8
        %s1035 = scalar_lea.vmem %s7, %s1034
      $region60: #{datanet_forward.1} parent=55 // pred_fallthru
        _
      // Predicated region
      $region61: #{datanet_forward.1} parent=55 // pred_check
        %p1036 = pneg %p262
      $region62: #{datanet_forward.1} parent=55 // pred_check_branch
        %1038 = sbr.rel (%p1036) target = $region64
      $region63: #{datanet_forward.1} parent=55 // pred_region
        %p1039 = scmp.lt.s32.totalorder %s34, 1
        %s1040 = scalar_select %p1039, %s34, 1
        %p1041 = scmp.lt.s32.totalorder %s35, 0
        %s1042 = scalar_select %p1041, %s35, 0
        %s1043 = smul.addr %s1042, 2
        %s1044 = smul.addr %s1040, 12
        %s1045 = sadd.s32 %s1043, %s1044
        %s1046 = smul.addr %s1045, 8
        %s1047 = scalar_lea.vmem %s8, %s1046
      $region64: #{datanet_forward.1} parent=55 // pred_fallthru
        _
    $region56: #{datanet_forward.1} parent=5 // pred_fallthru
      _
  $region6: #{datanet_forward.1} parent=0 // loop_footer
    %s27 = sadd.s32 1, %s23
  $region7: #{datanet_forward.1} parent=0 // loop_footer_branch
    %22 = sbr.rel target = $region3
  $region8: #{datanet_forward.1} parent=0 // loop_exit
    _

</llo_original>
